<compile_context>
chip_gen: v5e
topology: v5e:2x2
jax: 0.10.0
libtpu: 0.0.40
codegen_flags: <defaults>
</compile_context>

<pallas_src>
import jax
import jax.numpy as jnp
import numpy as np
from jax.experimental import pallas as pl
from jax.experimental.pallas import tpu as pltpu


def _decoder_kernel(x_ref, wt_ref, b_ref, out_ref):
    # x_ref:   (tile_n, C_in) f32 VMEM
    # wt_ref:  (C_in, 2)      f32 VMEM   (pre-masked, pre-transposed weight)
    # b_ref:   (2,)           f32 SMEM   (conv bias)
    # out_ref: (tile_n, 2)    f32 VMEM   (log-softmax output)
    y = jnp.dot(x_ref[...], wt_ref[...], preferred_element_type=jnp.float32)
    y0 = y[:, 0:1] + b_ref[0]
    y1 = y[:, 1:2] + b_ref[1]
    d = y0 - y1
    # 2-class log-softmax, closed form:
    #   lse = max(y0, y1) + log(1 + exp(-|y0 - y1|))   (exp(-|d|) in (0, 1] -> stable)
    lse = jnp.maximum(y0, y1) + jnp.log(1.0 + jnp.exp(-jnp.abs(d)))
    out_ref[:, 0:1] = y0 - lse
    out_ref[:, 1:2] = y1 - lse


def face_attribute_fullconv_decoder(x_nchw, mask_passthrough, weight, bias,
                                    task_connectivity):
    """Forward pass of FaceAttributeFullConvDecoder.

    x_nchw:            (N, 512, 1, 1) float32
    weight:            (2, 512, 1, 1) float32   (ordinary_conv.weight)
    bias:              (2,)           float32   (ordinary_conv.bias)
    task_connectivity: (co_chunks, ci_chunks) float32
    Returns (log_probs (N, 2), mask_passthrough).
    """
    N, C_in, H, W = x_nchw.shape
    assert H == 1 and W == 1, "decoder expects 1x1 spatial input (squeeze semantics)"
    C_out = weight.shape[0]
    assert C_out == 2, "closed-form log_softmax kernel assumes 2 output classes"
    co_chunks, ci_chunks = task_connectivity.shape
    assert C_out % co_chunks == 0 and C_in % ci_chunks == 0, (
        "channel counts must be divisible by the connectivity grid")
    out_chunk = C_out // co_chunks
    in_chunk = C_in // ci_chunks

    # --- static (x-independent) preprocessing: binarize, kron-expand, mask, transpose ---
    bin_conn = jnp.where(task_connectivity.astype(jnp.float32) > 0.5, 1.0, 0.0)
    mask = jnp.kron(bin_conn, jnp.ones((out_chunk, in_chunk), jnp.float32))   # (Cout, Cin)
    w_masked_t = (weight.reshape(C_out, C_in).astype(jnp.float32) * mask).T   # (Cin, Cout)
    b = bias.astype(jnp.float32).reshape(C_out)

    x2 = x_nchw.reshape(N, C_in).astype(jnp.float32)

    # --- tile the batch axis; pad N so blocks divide evenly (sublane multiple of 8) ---
    max_tile = 512
    n_pad8 = ((N + 7) // 8) * 8
    if n_pad8 <= max_tile:
        tile_n, n_padded = n_pad8, n_pad8
    else:
        tile_n = max_tile
        n_padded = ((N + tile_n - 1) // tile_n) * tile_n
    if n_padded != N:
        x2 = jnp.pad(x2, ((0, n_padded - N), (0, 0)))

    grid = (n_padded // tile_n,)

    log_probs = pl.pallas_call(
        _decoder_kernel,
        out_shape=jax.ShapeDtypeStruct((n_padded, C_out), jnp.float32),
        grid=grid,
        in_specs=[
            pl.BlockSpec((tile_n, C_in), lambda i: (i, 0)),       # x tiles over batch
            pl.BlockSpec((C_in, C_out), lambda i: (0, 0)),        # weight resident
            pl.BlockSpec(memory_space=pltpu.MemorySpace.SMEM),    # bias scalars
        ],
        out_specs=pl.BlockSpec((tile_n, C_out), lambda i: (i, 0)),
        compiler_params=pltpu.CompilerParams(
            dimension_semantics=("parallel",)),
    )(x2, w_masked_t, b)

    return log_probs[:N], mask_passthrough


def _reference(x_nchw, weight, bias, task_connectivity):
    N, C_in, _, _ = x_nchw.shape
    C_out = weight.shape[0]
    out_chunk = C_out // task_connectivity.shape[0]
    in_chunk = C_in // task_connectivity.shape[1]
    bin_conn = jnp.where(task_connectivity > 0.5, 1.0, 0.0)
    mask = jnp.kron(bin_conn, jnp.ones((out_chunk, in_chunk), jnp.float32))
    mw = weight.reshape(C_out, C_in) * mask
    y = x_nchw.reshape(N, C_in) @ mw.T + bias[None, :]
    return jax.nn.log_softmax(y, axis=1)


if __name__ == "__main__":
    key = jax.random.PRNGKey(0)
    k_x, k_w, k_b, k_c, k_m = jax.random.split(key, 5)

    N, C_in, C_out = 2, 512, 2
    x = jax.random.normal(k_x, (N, C_in, 1, 1), dtype=jnp.float32)
    weight = jax.random.normal(k_w, (C_out, C_in, 1, 1), dtype=jnp.float32) * 0.05
    bias = jax.random.normal(k_b, (C_out,), dtype=jnp.float32) * 0.1
    # task_connectivity: (out_chunks, in_chunks); values in [0,1] so binarization mixes 0/1
    task_connectivity = jax.random.uniform(k_c, (C_out, 8), dtype=jnp.float32)
    # segmentation mask that the decoder just passes through
    seg_mask = jax.random.uniform(k_m, (N, 1, 16, 16), dtype=jnp.float32)

    out, passed_mask = face_attribute_fullconv_decoder(
        x, seg_mask, weight, bias, task_connectivity)
    out = jax.block_until_ready(out)
    passed_mask = jax.block_until_ready(passed_mask)

    ref = _reference(x, weight, bias, task_connectivity)
    np.testing.assert_allclose(np.asarray(out), np.asarray(ref), rtol=1e-5, atol=1e-5)
    assert out.shape == (N, C_out)
    assert passed_mask.shape == seg_mask.shape

    print("KERNEL_OK")
</pallas_src>

<mosaic_0001>
module attributes {stable_mosaic.version = 11 : i64} {
  func.func @_decoder_kernel(%arg0: i32, %arg1: memref<8x512xf32, #tpu.memory_space<vmem>>, %arg2: memref<512x2xf32, #tpu.memory_space<vmem>>, %arg3: memref<2xf32, #tpu.memory_space<smem>>, %arg4: memref<8x2xf32, #tpu.memory_space<vmem>>) attributes {dimension_semantics = [#tpu.dimension_semantics<parallel>], iteration_bounds = array<i64: 1>, scalar_prefetch = 0 : i64, scratch_operands = 0 : i64, tpu.core_type = #tpu.core_type<tc>, window_params = [{transform_indices = @transform_0, window_bounds = array<i64: 8, 512>}, {pipeline_mode = #tpu.pipeline_mode<synchronous>, transform_indices = @transform_1, window_bounds = array<i64: 512, 2>}, {transform_indices = @transform_2, window_bounds = array<i64: 2>}, {transform_indices = @transform_3, window_bounds = array<i64: 8, 2>}]} {
    %c0 = arith.constant 0 : index
    %c0_0 = arith.constant 0 : index
    %0 = vector.load %arg1[%c0, %c0_0] : memref<8x512xf32, #tpu.memory_space<vmem>>, vector<8x512xf32>
    %c0_1 = arith.constant 0 : index
    %c0_2 = arith.constant 0 : index
    %1 = vector.load %arg2[%c0_1, %c0_2] : memref<512x2xf32, #tpu.memory_space<vmem>>, vector<512x2xf32>
    %cst = arith.constant dense<0.000000e+00> : vector<8x2xf32>
    %2 = tpu.matmul %0, %1, %cst {dimension_numbers = #tpu.dot_dimension_numbers<[1], [0], [0], [1], [0, 0, 1, 1], [], []>} : vector<8x512xf32>, vector<512x2xf32>, vector<8x2xf32> -> vector<8x2xf32>
    %3 = vector.extract_strided_slice %2 {offsets = [0, 0], sizes = [8, 1], strides = [1, 1]} : vector<8x2xf32> to vector<8x1xf32>
    %c0_3 = arith.constant 0 : index
    %4 = memref.load %arg3[%c0_3] : memref<2xf32, #tpu.memory_space<smem>>
    %5 = vector.broadcast %4 : f32 to vector<8x1xf32>
    %6 = arith.addf %3, %5 : vector<8x1xf32>
    %7 = vector.extract_strided_slice %2 {offsets = [0, 1], sizes = [8, 1], strides = [1, 1]} : vector<8x2xf32> to vector<8x1xf32>
    %c1 = arith.constant 1 : index
    %8 = memref.load %arg3[%c1] : memref<2xf32, #tpu.memory_space<smem>>
    %9 = vector.broadcast %8 : f32 to vector<8x1xf32>
    %10 = arith.addf %7, %9 : vector<8x1xf32>
    %11 = arith.subf %6, %10 : vector<8x1xf32>
    %12 = arith.maximumf %6, %10 : vector<8x1xf32>
    %13 = math.absf %11 : vector<8x1xf32>
    %cst_4 = arith.constant 0.000000e+00 : f32
    %14 = vector.broadcast %cst_4 : f32 to vector<8x1xf32>
    %15 = arith.subf %14, %13 : vector<8x1xf32>
    %16 = math.exp %15 : vector<8x1xf32>
    %cst_5 = arith.constant 1.000000e+00 : f32
    %17 = vector.broadcast %cst_5 : f32 to vector<8x1xf32>
    %18 = arith.addf %17, %16 : vector<8x1xf32>
    %19 = math.log %18 : vector<8x1xf32>
    %20 = arith.addf %12, %19 : vector<8x1xf32>
    %21 = arith.subf %6, %20 : vector<8x1xf32>
    %c0_6 = arith.constant 0 : index
    %c0_7 = arith.constant 0 : index
    %22 = vector.load %arg4[%c0_6, %c0_7] : memref<8x2xf32, #tpu.memory_space<vmem>>, vector<8x1xf32>
    tpu.vector_store %arg4[%c0_6, %c0_7], %21 {strides = array<i32>} : memref<8x2xf32, #tpu.memory_space<vmem>>, vector<8x1xf32>,
    %23 = arith.subf %10, %20 : vector<8x1xf32>
    %c0_8 = arith.constant 0 : index
    %c1_9 = arith.constant 1 : index
    %24 = vector.load %arg4[%c0_8, %c1_9] : memref<8x2xf32, #tpu.memory_space<vmem>>, vector<8x1xf32>
    tpu.vector_store %arg4[%c0_8, %c1_9], %23 {strides = array<i32>} : memref<8x2xf32, #tpu.memory_space<vmem>>, vector<8x1xf32>,
    return
  }
  func.func @transform_0(%arg0: i32) -> (i32, i32) {
    %c0_i32 = arith.constant 0 : i32
    %c0_i32_0 = arith.constant 0 : i32
    return %arg0, %c0_i32 : i32, i32
  }
  func.func @transform_1(%arg0: i32) -> (i32, i32) {
    %c0_i32 = arith.constant 0 : i32
    %c0_i32_0 = arith.constant 0 : i32
    %c0_i32_1 = arith.constant 0 : i32
    return %c0_i32, %c0_i32_0 : i32, i32
  }
  func.func @transform_2(%arg0: i32) -> i32 {
    %c0_i32 = arith.constant 0 : i32
    %c0_i32_0 = arith.constant 0 : i32
    return %c0_i32 : i32
  }
  func.func @transform_3(%arg0: i32) -> (i32, i32) {
    %c0_i32 = arith.constant 0 : i32
    %c0_i32_0 = arith.constant 0 : i32
    return %arg0, %c0_i32 : i32, i32
  }
}

</mosaic_0001>

<llo_original>
// kernel: tpu_custom_call.1
$region0: #{tpu_custom_call.1}
  #allocation0 [shape = 'u32[]', space=smem, size = 0x4, offset = 0x4, fixed_abs, tag = 'smem constant byte address 0x4 - core index']
  #allocation1 [shape = 'u32[72,128]{1,0:T(1,128)}', space=vmem, size = 0x9000, scoped, tag = 'internal scratch']
  %s0 = inlined_call_operand.vmem [shape: f32[8,512], index: 0, kind: input, shape index: {}]
  %s1 = inlined_call_operand.vmem [shape: f32[512,2], index: 1, kind: input, shape index: {}]
  %s2 = inlined_call_operand.vmem [shape: f32[2], index: 2, kind: input, shape index: {}]
  %s3 = inlined_call_operand.vmem [shape: f32[8,2], index: 3, kind: output, shape index: {}]
  %s4 = sld [smem:[#allocation0]]
  $region26: #{tpu_custom_call.1} parent=0
    _
  %s6 = ssub.s32 1, %s4
  %s7 = scalar_select 0, %s6, %s4
  $region1: #{tpu_custom_call.1} parent=0
    #allocation2 [shape = 'u8[512]{0}', space=smem, size = 0x200, scoped, tag = 'input window, operand 2, single buffered']
    #allocation3 [shape = 's32[1]{0}', space=sflag, size = 0x4, scoped, tag = 'scoped memory for tpu_custom_call.1']
    %8 = vsyncpa [#allocation3], 0
    // Predicated region
    $region2: #{tpu_custom_call.1} parent=1 // pred_check
      _
    $region3: #{tpu_custom_call.1} parent=1 // pred_check_branch
      %10 = sbr.rel (0) target = $region5
    $region4: #{tpu_custom_call.1} parent=1 // pred_region
      _
    $region5: #{tpu_custom_call.1} parent=1 // pred_fallthru
      _
    // Predicated region
    $region6: #{tpu_custom_call.1} parent=1 // pred_check
      _
    $region7: #{tpu_custom_call.1} parent=1 // pred_check_branch
      %12 = sbr.rel (0) target = $region9
    $region8: #{tpu_custom_call.1} parent=1 // pred_region
      _
    $region9: #{tpu_custom_call.1} parent=1 // pred_fallthru
      _
    // Predicated region
    $region10: #{tpu_custom_call.1} parent=1 // pred_check
      _
    $region11: #{tpu_custom_call.1} parent=1 // pred_check_branch
      %14 = sbr.rel (0) target = $region13
    $region12: #{tpu_custom_call.1} parent=1 // pred_region
      %16 = vsyncadd [#allocation3], 0
      %s18 = sshll.u32 %s2, 4
      %s19 = int_to_ptr.vmem [resolvable:$true] %s18
      %21 = dma.vmem_to_smem %s19, 16, [#allocation2], [#allocation3]
    $region13: #{tpu_custom_call.1} parent=1 // pred_fallthru
      _
    // Predicated region
    $region14: #{tpu_custom_call.1} parent=1 // pred_check
      _
    $region15: #{tpu_custom_call.1} parent=1 // pred_check_branch
      %23 = sbr.rel (0) target = $region17
    $region16: #{tpu_custom_call.1} parent=1 // pred_region
      %25 = dma.done [#allocation3], 16
    $region17: #{tpu_custom_call.1} parent=1 // pred_fallthru
      _
    %26 = sfence
    %v27 = vld [vmem:[%s0] sm:$0xff]
    %v28 = vld [vmem:[%s0 + $0x8] sm:$0xff]
    %v29 = vld [vmem:[%s0 + $0x10] sm:$0xff]
    %v30 = vld [vmem:[%s0 + $0x18] sm:$0xff]
    %v31 = vld [vmem:[%s1] sm:$0xff]
    %v32 = vld [vmem:[%s1 + $0x8] sm:$0xff]
    %v33 = vld [vmem:[%s1 + $0x10] sm:$0xff]
    %v34 = vld [vmem:[%s1 + $0x18] sm:$0xff]
    %v35 = vld [vmem:[%s1 + $0x20] sm:$0xff]
    %v36 = vld [vmem:[%s1 + $0x28] sm:$0xff]
    %v37 = vld [vmem:[%s1 + $0x30] sm:$0xff]
    %v38 = vld [vmem:[%s1 + $0x38] sm:$0xff]
    %v39 = vld [vmem:[%s1 + $0x40] sm:$0xff]
    %v40 = vld [vmem:[%s1 + $0x48] sm:$0xff]
    %v41 = vld [vmem:[%s1 + $0x50] sm:$0xff]
    %v42 = vld [vmem:[%s1 + $0x58] sm:$0xff]
    %v43 = vld [vmem:[%s1 + $0x60] sm:$0xff]
    %v44 = vld [vmem:[%s1 + $0x68] sm:$0xff]
    %v45 = vld [vmem:[%s1 + $0x70] sm:$0xff]
    %v46 = vld [vmem:[%s1 + $0x78] sm:$0xff]
    %v47 = vld [vmem:[%s1 + $0x80] sm:$0xff]
    %v48 = vld [vmem:[%s1 + $0x88] sm:$0xff]
    %v49 = vld [vmem:[%s1 + $0x90] sm:$0xff]
    %v50 = vld [vmem:[%s1 + $0x98] sm:$0xff]
    %v51 = vld [vmem:[%s1 + $0xa0] sm:$0xff]
    %v52 = vld [vmem:[%s1 + $0xa8] sm:$0xff]
    %v53 = vld [vmem:[%s1 + $0xb0] sm:$0xff]
    %v54 = vld [vmem:[%s1 + $0xb8] sm:$0xff]
    %v55 = vld [vmem:[%s1 + $0xc0] sm:$0xff]
    %v56 = vld [vmem:[%s1 + $0xc8] sm:$0xff]
    %v57 = vld [vmem:[%s1 + $0xd0] sm:$0xff]
    %v58 = vld [vmem:[%s1 + $0xd8] sm:$0xff]
    %v59 = vld [vmem:[%s1 + $0xe0] sm:$0xff]
    %v60 = vld [vmem:[%s1 + $0xe8] sm:$0xff]
    %v61 = vld [vmem:[%s1 + $0xf0] sm:$0xff]
    %v62 = vld [vmem:[%s1 + $0xf8] sm:$0xff]
    %v63 = vld [vmem:[%s1 + $0x100] sm:$0xff]
    %v64 = vld [vmem:[%s1 + $0x108] sm:$0xff]
    %v65 = vld [vmem:[%s1 + $0x110] sm:$0xff]
    %v66 = vld [vmem:[%s1 + $0x118] sm:$0xff]
    %v67 = vld [vmem:[%s1 + $0x120] sm:$0xff]
    %v68 = vld [vmem:[%s1 + $0x128] sm:$0xff]
    %v69 = vld [vmem:[%s1 + $0x130] sm:$0xff]
    %v70 = vld [vmem:[%s1 + $0x138] sm:$0xff]
    %v71 = vld [vmem:[%s1 + $0x140] sm:$0xff]
    %v72 = vld [vmem:[%s1 + $0x148] sm:$0xff]
    %v73 = vld [vmem:[%s1 + $0x150] sm:$0xff]
    %v74 = vld [vmem:[%s1 + $0x158] sm:$0xff]
    %v75 = vld [vmem:[%s1 + $0x160] sm:$0xff]
    %v76 = vld [vmem:[%s1 + $0x168] sm:$0xff]
    %v77 = vld [vmem:[%s1 + $0x170] sm:$0xff]
    %v78 = vld [vmem:[%s1 + $0x178] sm:$0xff]
    %v79 = vld [vmem:[%s1 + $0x180] sm:$0xff]
    %v80 = vld [vmem:[%s1 + $0x188] sm:$0xff]
    %v81 = vld [vmem:[%s1 + $0x190] sm:$0xff]
    %v82 = vld [vmem:[%s1 + $0x198] sm:$0xff]
    %v83 = vld [vmem:[%s1 + $0x1a0] sm:$0xff]
    %v84 = vld [vmem:[%s1 + $0x1a8] sm:$0xff]
    %v85 = vld [vmem:[%s1 + $0x1b0] sm:$0xff]
    %v86 = vld [vmem:[%s1 + $0x1b8] sm:$0xff]
    %v87 = vld [vmem:[%s1 + $0x1c0] sm:$0xff]
    %v88 = vld [vmem:[%s1 + $0x1c8] sm:$0xff]
    %v89 = vld [vmem:[%s1 + $0x1d0] sm:$0xff]
    %v90 = vld [vmem:[%s1 + $0x1d8] sm:$0xff]
    %v91 = vld [vmem:[%s1 + $0x1e0] sm:$0xff]
    %v92 = vld [vmem:[%s1 + $0x1e8] sm:$0xff]
    %v93 = vld [vmem:[%s1 + $0x1f0] sm:$0xff]
    %v94 = vld [vmem:[%s1 + $0x1f8] sm:$0xff]
    %95 = vmatpush.msra.mxu0 %v46
    %96 = vmatpush.msra.mxu0 %v45
    %97 = vmatpush.msra.mxu0 %v44
    %98 = vmatpush.msra.mxu0 %v43
    %99 = vmatpush.msra.mxu0 %v42
    %100 = vmatpush.msra.mxu0 %v41
    %101 = vmatpush.msra.mxu0 %v40
    %102 = vmatpush.msra.mxu0 %v39
    %103 = vmatpush.msra.mxu0 %v38
    %104 = vmatpush.msra.mxu0 %v37
    %105 = vmatpush.msra.mxu0 %v36
    %106 = vmatpush.msra.mxu0 %v35
    %107 = vmatpush.msra.mxu0 %v34
    %108 = vmatpush.msra.mxu0 %v33
    %109 = vmatpush.msra.mxu0 %v32
    %110 = vmatpush.msra.mxu0 %v31
    %111 = vmatmul.f32.gmra.mxu0 %v27
    %v112 = vpop.f32.mrf.mxu0
    %v113 = vadd.f32 0.0, %v112
    %114 = vdwg.mxu0
    %115 = vmatpush.msra.mxu0 %v62
    %116 = vmatpush.msra.mxu0 %v61
    %117 = vmatpush.msra.mxu0 %v60
    %118 = vmatpush.msra.mxu0 %v59
    %119 = vmatpush.msra.mxu0 %v58
    %120 = vmatpush.msra.mxu0 %v57
    %121 = vmatpush.msra.mxu0 %v56
    %122 = vmatpush.msra.mxu0 %v55
    %123 = vmatpush.msra.mxu0 %v54
    %124 = vmatpush.msra.mxu0 %v53
    %125 = vmatpush.msra.mxu0 %v52
    %126 = vmatpush.msra.mxu0 %v51
    %127 = vmatpush.msra.mxu0 %v50
    %128 = vmatpush.msra.mxu0 %v49
    %129 = vmatpush.msra.mxu0 %v48
    %130 = vmatpush.msra.mxu0 %v47
    %131 = vmatmul.f32.gmra.mxu0 %v28
    %v132 = vpop.f32.mrf.mxu0
    %v133 = vadd.f32 %v113, %v132
    %134 = vdwg.mxu0
    %135 = vmatpush.msra.mxu0 %v78
    %136 = vmatpush.msra.mxu0 %v77
    %137 = vmatpush.msra.mxu0 %v76
    %138 = vmatpush.msra.mxu0 %v75
    %139 = vmatpush.msra.mxu0 %v74
    %140 = vmatpush.msra.mxu0 %v73
    %141 = vmatpush.msra.mxu0 %v72
    %142 = vmatpush.msra.mxu0 %v71
    %143 = vmatpush.msra.mxu0 %v70
    %144 = vmatpush.msra.mxu0 %v69
    %145 = vmatpush.msra.mxu0 %v68
    %146 = vmatpush.msra.mxu0 %v67
    %147 = vmatpush.msra.mxu0 %v66
    %148 = vmatpush.msra.mxu0 %v65
    %149 = vmatpush.msra.mxu0 %v64
    %150 = vmatpush.msra.mxu0 %v63
    %151 = vmatmul.f32.gmra.mxu0 %v29
    %v152 = vpop.f32.mrf.mxu0
    %v153 = vadd.f32 %v133, %v152
    %154 = vdwg.mxu0
    %155 = vmatpush.msra.mxu0 %v94
    %156 = vmatpush.msra.mxu0 %v93
    %157 = vmatpush.msra.mxu0 %v92
    %158 = vmatpush.msra.mxu0 %v91
    %159 = vmatpush.msra.mxu0 %v90
    %160 = vmatpush.msra.mxu0 %v89
    %161 = vmatpush.msra.mxu0 %v88
    %162 = vmatpush.msra.mxu0 %v87
    %163 = vmatpush.msra.mxu0 %v86
    %164 = vmatpush.msra.mxu0 %v85
    %165 = vmatpush.msra.mxu0 %v84
    %166 = vmatpush.msra.mxu0 %v83
    %167 = vmatpush.msra.mxu0 %v82
    %168 = vmatpush.msra.mxu0 %v81
    %169 = vmatpush.msra.mxu0 %v80
    %170 = vmatpush.msra.mxu0 %v79
    %171 = vmatmul.f32.gmra.mxu0 %v30
    %v172 = vpop.f32.mrf.mxu0
    %v173 = vadd.f32 %v153, %v172
    %174 = vdwg.mxu0
    %s175 = sld [smem:[#allocation2]]
    %v176 = vstv %s175
    %v177 = vadd.f32 %v173, %v176
    %s178 = sld [smem:[#allocation2 + $0x1]]
    %v179 = vstv %s178
    %v180 = vadd.f32 %v173, %v179
    %182 = vrot.lane.b32.xlu0 %v180, 127
    %v183 = vpop.permute.xlu0 %182
    %v185 = vsub.f32 %v177, %v183
    %v186 = vmax.f32 %v177, %v183
    %v187 = vand.u32 2147483647, %v185
    %v188 = vsub.f32 0.0, %v187
    %v189 = vmul.f32 %v188, 1.442695
    %v190 = vpow.pop %v189
    %v191 = vadd.f32 %v190, 1.0
    %v192 = vlog2.pop %v191
    %v193 = vmul.f32 %v192, 0.6931472
    %v194 = vadd.f32 %v186, %v193
    %v195 = vsub.f32 %v177, %v194
    %vm196 = vcmask 7168
    %197 = vst.msk [vmem:[%s3] sm:$0xff] %vm196, %v195
    %199 = vrot.lane.b32.xlu0 %v194, 1
    %v200 = vpop.permute.xlu0 %199
    %v202 = vsub.f32 %v180, %v200
    %vm203 = vcmask 15368
    %204 = vst.msk [vmem:[%s3] sm:$0xff] %vm203, %v202
    // Predicated region
    $region18: #{tpu_custom_call.1} parent=1 // pred_check
      _
    $region19: #{tpu_custom_call.1} parent=1 // pred_check_branch
      %206 = sbr.rel (0) target = $region21
    $region20: #{tpu_custom_call.1} parent=1 // pred_region
      _
    $region21: #{tpu_custom_call.1} parent=1 // pred_fallthru
      _
    // Predicated region
    $region22: #{tpu_custom_call.1} parent=1 // pred_check
      _
    $region23: #{tpu_custom_call.1} parent=1 // pred_check_branch
      %208 = sbr.rel (0) target = $region25
    $region24: #{tpu_custom_call.1} parent=1 // pred_region
      _
    $region25: #{tpu_custom_call.1} parent=1 // pred_fallthru
      _
    %209 = vsyncpa [#allocation3], 1

</llo_original>
